<compile_context>
chip_gen: v7x
topology: tpu7x:2x2x1
jax: 0.10.0
libtpu: 0.0.40
codegen_flags: <defaults>
</compile_context>

<pallas_src>
import jax
import jax.numpy as jnp
import numpy as np
from jax import lax
from jax.experimental import pallas as pl
from jax.experimental.pallas import tpu as pltpu

_LANES = 512           # lane-dense last dim (multiple of 128 -> unmasked vld/vst)
_MAX_BLOCK_ROWS = 1024  # 1024x512 f32 tile = 2 MiB; 2 inputs x 2 bufs = 8 MiB VMEM
                        # (fits every generation's scoped default with margin)


def _ceil_div(a: int, b: int) -> int:
    return -(-a // b)


# --------------------------- Path A: small level ------------------------------
# Whole level fits in one block (<= _MAX_BLOCK_ROWS rows): single-step kernel.
def _sumsq_small_kernel(p_ref, t_ref, o_ref):
    d = p_ref[...].astype(jnp.float32) - t_ref[...].astype(jnp.float32)
    o_ref[0, 0] = jnp.sum(d * d)


def _sumsq_small(p2: jax.Array, t2: jax.Array) -> jax.Array:
    R, L = p2.shape
    out = pl.pallas_call(
        _sumsq_small_kernel,
        out_shape=jax.ShapeDtypeStruct((1, 1), jnp.float32),
        grid_spec=pltpu.PrefetchScalarGridSpec(
            num_scalar_prefetch=0,
            grid=(1,),
            in_specs=[
                pl.BlockSpec((R, L), lambda i: (0, 0)),
                pl.BlockSpec((R, L), lambda i: (0, 0)),
            ],
            out_specs=pl.BlockSpec(
                (1, 1), lambda i: (0, 0), memory_space=pltpu.MemorySpace.SMEM
            ),
        ),
        compiler_params=pltpu.CompilerParams(dimension_semantics=("arbitrary",)),
    )(p2, t2)
    return out[0, 0]


# --------------------- Path B: large level, tiled + megacore ------------------
def _make_sumsq_tiled_kernel(block_rows: int, lanes: int, nb2: int, valid_rows: int):
    """Streaming sum((p-t)^2) over row tiles; 2 TensorCores, tiny out-block acc."""
    need_mask = (2 * nb2 * block_rows) != valid_rows
    folds = block_rows // 8

    def kernel(p_ref, t_ref, o_ref):
        i = pl.program_id(1)

        @pl.when(i == 0)
        def _():
            o_ref[...] = jnp.zeros_like(o_ref)

        d = p_ref[...].astype(jnp.float32) - t_ref[...].astype(jnp.float32)
        sq = d * d
        if need_mask:
            # Rows past the end of the level (partial last tile / phantom tile
            # on the odd-block core) carry undefined data -> zero them.
            blk = pl.program_id(0) * nb2 + i
            valid = valid_rows - blk * block_rows
            rows = lax.broadcasted_iota(jnp.int32, (block_rows, lanes), 0)
            sq = jnp.where(rows < valid, sq, 0.0)
        # Fold the tile down to one (8, lanes) vreg-row group (tile-aligned
        # reshape, cross-vreg VPU adds) and accumulate into the resident
        # output block -> no full-tile accumulator round-trip, no scratch.
        o_ref[...] += sq.reshape(folds, 8, lanes).sum(axis=0)[None]

    return kernel


def _sumsq_tiled(p2: jax.Array, t2: jax.Array, block_rows: int) -> jax.Array:
    R, L = p2.shape
    nb_total = _ceil_div(R, block_rows)
    nb2 = _ceil_div(nb_total, 2)  # row tiles per TensorCore

    def in_map(c, i):
        # Clamp so the phantom tile (odd nb_total) never indexes out of range;
        # its rows are masked to zero inside the kernel anyway.
        return (jnp.minimum(c * nb2 + i, nb_total - 1), 0)

    kernel = _make_sumsq_tiled_kernel(block_rows, L, nb2, R)
    # TODO(synk): sweep pipeline_mode=pl.Buffered(3) on the two input streams
    # for v7x if xprof shows exposed DMA gaps.
    out = pl.pallas_call(
        kernel,
        out_shape=jax.ShapeDtypeStruct((2, 8, L), jnp.float32),
        grid_spec=pltpu.PrefetchScalarGridSpec(
            num_scalar_prefetch=0,
            grid=(2, nb2),
            in_specs=[
                pl.BlockSpec((block_rows, L), in_map),
                pl.BlockSpec((block_rows, L), in_map),
            ],
            out_specs=pl.BlockSpec((1, 8, L), lambda c, i: (c, 0, 0)),
        ),
        compiler_params=pltpu.CompilerParams(
            dimension_semantics=("parallel", "arbitrary"),
            vmem_limit_bytes=32 * 1024 * 1024,
        ),
    )(p2, t2)
    # Tiny (2, 8, 512) partials -> per-core + cross-lane reduce in XLA.
    return jnp.sum(out)


# ------------------------------ per-level glue --------------------------------
def _level_sum_sq(y_pred: jax.Array, y_scaled: jax.Array, max_block_rows: int):
    """sum((y_pred - y_scaled)**2) in f32, no slab materialization."""
    n_elem = int(y_pred.size)
    pf = y_pred.reshape(-1)   # contiguous reshape: free
    tf = y_scaled.reshape(-1)
    pad = (-n_elem) % _LANES
    if pad:
        # Fallback for levels whose size is not a multiple of 512 (rare; only
        # touches that level).  Padded elements are zero in both operands.
        pf = jnp.concatenate([pf, jnp.zeros((pad,), pf.dtype)])
        tf = jnp.concatenate([tf, jnp.zeros((pad,), tf.dtype)])
    R = (n_elem + pad) // _LANES
    p2 = pf.reshape(R, _LANES)
    t2 = tf.reshape(R, _LANES)
    if R <= max_block_rows:
        return _sumsq_small(p2, t2)
    block_rows = max(8, (max_block_rows // 8) * 8)
    return _sumsq_tiled(p2, t2, block_rows)


def _nearest_resize_nchw(y: jax.Array, out_h: int, out_w: int) -> jax.Array:
    """PyTorch nn.Upsample(size=(out_h, out_w), mode='nearest') on NCHW."""
    B, C, H, W = y.shape
    if (out_h, out_w) == (H, W):
        return y  # identity: zero extra HBM traffic for the dominant level
    if out_h <= H and out_w <= W and H % out_h == 0 and W % out_w == 0:
        # Integer-ratio downsample: strided slice == floor(dst * H/out_h).
        return y[:, :, :: H // out_h, :: W // out_w]
    ri = jnp.minimum(
        jnp.floor(jnp.arange(out_h) * (H / out_h)).astype(jnp.int32), H - 1
    )
    ci = jnp.minimum(
        jnp.floor(jnp.arange(out_w) * (W / out_w)).astype(jnp.int32), W - 1
    )
    return y[:, :, ri[:, None], ci[None, :]]  # single fused gather
    # TODO(synk): fuse this gather into the kernel's target index_map
    # (scalar-prefetched row table + pl.Element) to avoid materializing the
    # resized lower-level targets (~10-15% of traffic for 4x pyramids).


def deep_supervision_loss(
    y_preds: list[jax.Array], y: jax.Array, max_block_rows: int = _MAX_BLOCK_ROWS
) -> jax.Array:
    """Weighted sum of per-level MSE losses (levels ordered low-res -> high-res)."""
    n = len(y_preds)
    weights = [1.0 / 2 ** i for i in range(n)]
    wsum = sum(weights)
    weights = [w / wsum for w in weights]

    total = jnp.float32(0.0)
    for weight, y_pred in zip(reversed(weights), y_preds):
        _, _, h, w = y_pred.shape
        y_scaled = _nearest_resize_nchw(y, h, w)
        sumsq = _level_sum_sq(y_pred, y_scaled, max_block_rows)
        # weight * mean == (weight / N) * sum, applied once per level (epilogue).
        total = total + (weight / float(y_pred.size)) * sumsq
    return total


# ------------------------------ reference ------------------------------------
def _reference_resize(y, out_h, out_w):
    B, C, H, W = y.shape
    ri = jnp.minimum(
        jnp.floor(jnp.arange(out_h) * (H / out_h)).astype(jnp.int32), H - 1
    )
    ci = jnp.minimum(
        jnp.floor(jnp.arange(out_w) * (W / out_w)).astype(jnp.int32), W - 1
    )
    return y[:, :, ri][:, :, :, ci]


def _reference_loss(y_preds, y):
    n = len(y_preds)
    weights = [1.0 / 2 ** i for i in range(n)]
    wsum = sum(weights)
    weights = [w / wsum for w in weights]
    total = 0.0
    for weight, y_pred in zip(reversed(weights), y_preds):
        _, _, h, w = y_pred.shape
        y_scaled = _reference_resize(y, h, w)
        total = total + weight * jnp.mean(
            (y_pred.astype(jnp.float32) - y_scaled.astype(jnp.float32)) ** 2
        )
    return total


if __name__ == "__main__":
    key = jax.random.PRNGKey(0)
    k_y, k0, k1, k2, k_y2, k3, k4, k5 = jax.random.split(key, 8)

    # ---- Test 1: small U-Net pyramid (single-block path per level) ----------
    B, C, H, W = 2, 4, 16, 16
    y_preds = [
        jax.random.normal(k0, (B, C, 4, 4), dtype=jnp.float32),
        jax.random.normal(k1, (B, C, 8, 8), dtype=jnp.float32),
        jax.random.normal(k2, (B, C, H, W), dtype=jnp.float32),
    ]
    y = jax.random.normal(k_y, (B, C, H, W), dtype=jnp.float32)

    out = deep_supervision_loss(y_preds, y)
    jax.block_until_ready(out)
    ref = _reference_loss(y_preds, y)
    assert np.allclose(np.asarray(out), np.asarray(ref), rtol=1e-4, atol=1e-5), (
        out, ref
    )

    # ---- Test 2: force the tiled two-TensorCore path (tiny tile threshold) --
    # Exercises the (2, nb2) grid, partial-tile row masking and the odd-block
    # phantom-tile index clamp.
    B2, C2, H2, W2 = 2, 5, 32, 32
    y_preds2 = [
        jax.random.normal(k3, (B2, C2, 8, 8), dtype=jnp.float32),
        jax.random.normal(k4, (B2, C2, 16, 16), dtype=jnp.float32),
        jax.random.normal(k5, (B2, C2, H2, W2), dtype=jnp.float32),
    ]
    y2 = jax.random.normal(k_y2, (B2, C2, H2, W2), dtype=jnp.float32)

    out2 = deep_supervision_loss(y_preds2, y2, max_block_rows=8)
    jax.block_until_ready(out2)
    ref2 = _reference_loss(y_preds2, y2)
    assert np.allclose(np.asarray(out2), np.asarray(ref2), rtol=1e-4, atol=1e-5), (
        out2, ref2
    )

    print("KERNEL_OK")
</pallas_src>

<mosaic_0001>
module attributes {stable_mosaic.version = 11 : i64} {
  func.func @_sumsq_small_kernel(%arg0: i32, %arg1: memref<1x512xf32, #tpu.memory_space<vmem>>, %arg2: memref<1x512xf32, #tpu.memory_space<vmem>>, %arg3: memref<1x1xf32, #tpu.memory_space<smem>>) attributes {dimension_semantics = [#tpu.dimension_semantics<arbitrary>], iteration_bounds = array<i64: 1>, scalar_prefetch = 0 : i64, scratch_operands = 0 : i64, tpu.core_type = #tpu.core_type<tc>, window_params = [{pipeline_mode = #tpu.pipeline_mode<synchronous>, transform_indices = @transform_0, window_bounds = array<i64: 1, 512>}, {pipeline_mode = #tpu.pipeline_mode<synchronous>, transform_indices = @transform_1, window_bounds = array<i64: 1, 512>}, {transform_indices = @transform_2, window_bounds = array<i64: 1, 1>}]} {
    %c0 = arith.constant 0 : index
    %c0_0 = arith.constant 0 : index
    %0 = vector.load %arg1[%c0, %c0_0] : memref<1x512xf32, #tpu.memory_space<vmem>>, vector<1x512xf32>
    %c0_1 = arith.constant 0 : index
    %c0_2 = arith.constant 0 : index
    %1 = vector.load %arg2[%c0_1, %c0_2] : memref<1x512xf32, #tpu.memory_space<vmem>>, vector<1x512xf32>
    %2 = arith.subf %0, %1 : vector<1x512xf32>
    %3 = arith.mulf %2, %2 : vector<1x512xf32>
    %4 = vector.shape_cast %3 : vector<1x512xf32> to vector<1x1x512xf32>
    %cst = arith.constant dense<0.000000e+00> : vector<1xf32>
    %5 = vector.multi_reduction <add>, %4, %cst [1, 2] : vector<1x1x512xf32> to vector<1xf32>
    %6 = vector.shape_cast %5 : vector<1xf32> to vector<1x1x1xf32>
    %7 = vector.extract %6[0, 0, 0] : f32 from vector<1x1x1xf32>
    %c0_3 = arith.constant 0 : index
    %c0_4 = arith.constant 0 : index
    %8 = memref.load %arg3[%c0_3, %c0_4] : memref<1x1xf32, #tpu.memory_space<smem>>
    memref.store %7, %arg3[%c0_3, %c0_4] : memref<1x1xf32, #tpu.memory_space<smem>>
    return
  }
  func.func @transform_0(%arg0: i32) -> (i32, i32) {
    %c0_i32 = arith.constant 0 : i32
    %c0_i32_0 = arith.constant 0 : i32
    %c0_i32_1 = arith.constant 0 : i32
    return %c0_i32, %c0_i32_0 : i32, i32
  }
  func.func @transform_1(%arg0: i32) -> (i32, i32) {
    %c0_i32 = arith.constant 0 : i32
    %c0_i32_0 = arith.constant 0 : i32
    %c0_i32_1 = arith.constant 0 : i32
    return %c0_i32, %c0_i32_0 : i32, i32
  }
  func.func @transform_2(%arg0: i32) -> (i32, i32) {
    %c0_i32 = arith.constant 0 : i32
    %c0_i32_0 = arith.constant 0 : i32
    %c0_i32_1 = arith.constant 0 : i32
    return %c0_i32, %c0_i32_0 : i32, i32
  }
}

</mosaic_0001>

<llo_original>
// kernel: tpu_custom_call.1
$region0: #{tpu_custom_call.1}
  #allocation0 [shape = 'u32[]', space=smem, size = 0x4, offset = 0x4, fixed_abs, tag = 'smem constant byte address 0x4 - core index']
  #allocation1 [shape = 'u32[144,128]{1,0:T(1,128)}', space=vmem, size = 0x12000, scoped, tag = 'internal scratch']
  %s0 = inlined_call_operand.hbm [shape: f32[1,512], index: 0, kind: input, shape index: {}]
  %s1 = inlined_call_operand.hbm [shape: f32[1,512], index: 1, kind: input, shape index: {}]
  %s2 = inlined_call_operand.hbm [shape: f32[1,1], index: 2, kind: output, shape index: {}]
  %s3 = sld [smem:[#allocation0]]
  $region26: #{tpu_custom_call.1} parent=0
    _
  %s5 = ssub.s32 1, %s3
  %s6 = scalar_select 0, %s5, %s3
  $region1: #{tpu_custom_call.1} parent=0
    #allocation2 [shape = 'u8[2048]{0}', space=vmem, size = 0x800, scoped, tag = 'input window, operand 0, single buffered']
    #allocation3 [shape = 's32[1]{0}', space=sflag, size = 0x4, scoped, tag = 'scoped memory for tpu_custom_call.1']
    #allocation4 [shape = 's32[1]{0}', space=sflag, size = 0x4, scoped, tag = 'scoped memory for tpu_custom_call.1']
    #allocation5 [shape = 'u8[2048]{0}', space=vmem, size = 0x800, scoped, tag = 'input window, operand 1, single buffered']
    #allocation6 [shape = 's32[1]{0}', space=sflag, size = 0x4, scoped, tag = 'scoped memory for tpu_custom_call.1']
    #allocation7 [shape = 'u8[512]{0}', space=smem, size = 0x200, scoped, tag = 'output window, operand 0, single buffered']
    %7 = vsyncpa [#allocation3], 0
    %8 = vsyncpa [#allocation6], 0
    %9 = vsyncpa [#allocation4], 0
    // Predicated region
    $region2: #{tpu_custom_call.1} parent=1 // pred_check
      _
    $region3: #{tpu_custom_call.1} parent=1 // pred_check_branch
      %11 = sbr.rel (0) target = $region5
    $region4: #{tpu_custom_call.1} parent=1 // pred_region
      %s13 = ssub.s32 64, 64
      %14 = vsyncadd [#allocation3], %s13
      %s16 = sshll.u32 [#allocation2], 4
      %s17 = int_to_ptr.vmem [resolvable:$true] %s16
      %19 = dma.hbm_to_vmem [thread:$0]  %s0, 64, %s17, [#allocation3]
    $region5: #{tpu_custom_call.1} parent=1 // pred_fallthru
      _
    // Predicated region
    $region6: #{tpu_custom_call.1} parent=1 // pred_check
      _
    $region7: #{tpu_custom_call.1} parent=1 // pred_check_branch
      %21 = sbr.rel (0) target = $region9
    $region8: #{tpu_custom_call.1} parent=1 // pred_region
      %s23 = ssub.s32 64, 64
      %24 = vsyncadd [#allocation6], %s23
      %s26 = sshll.u32 [#allocation5], 4
      %s27 = int_to_ptr.vmem [resolvable:$true] %s26
      %29 = dma.hbm_to_vmem [thread:$0]  %s1, 64, %s27, [#allocation6]
    $region9: #{tpu_custom_call.1} parent=1 // pred_fallthru
      _
    // Predicated region
    $region10: #{tpu_custom_call.1} parent=1 // pred_check
      _
    $region11: #{tpu_custom_call.1} parent=1 // pred_check_branch
      %31 = sbr.rel (0) target = $region13
    $region12: #{tpu_custom_call.1} parent=1 // pred_region
      %32 = dma.done [#allocation3], 64
    $region13: #{tpu_custom_call.1} parent=1 // pred_fallthru
      _
    // Predicated region
    $region14: #{tpu_custom_call.1} parent=1 // pred_check
      _
    $region15: #{tpu_custom_call.1} parent=1 // pred_check_branch
      %34 = sbr.rel (0) target = $region17
    $region16: #{tpu_custom_call.1} parent=1 // pred_region
      %35 = dma.done [#allocation6], 64
    $region17: #{tpu_custom_call.1} parent=1 // pred_fallthru
      _
    %v36 = vld [vmem:[#allocation2] sm:$0xf]
    %v37 = vld [vmem:[#allocation5] sm:$0xf]
    %v38 = vsub.f32 %v36, %v37
    %v39 = vmul.f32 %v38, %v38
    %v41 = vlaneseq
    %v42 = vshrl.u32 %v41, 7
    %v43 = vsub.s32 0, %v42
    %v44 = vrot.slane %v39, %v43
    %v45 = vlaneseq
    %v46 = vshrl.u32 %v45, 7
    %v47 = vsub.s32 1, %v46
    %v48 = vrot.slane %v39, %v47
    %v49 = vlaneseq
    %v50 = vshrl.u32 %v49, 7
    %v51 = vsub.s32 2, %v50
    %v52 = vrot.slane %v39, %v51
    %v53 = vlaneseq
    %v54 = vshrl.u32 %v53, 7
    %v55 = vsub.s32 3, %v54
    %v56 = vrot.slane %v39, %v55
    %vm61 = vcmask 1040384
    %v62 = vsel %vm61, %v44, 0.0
    %v63 = vsel %vm61, %v48, 0.0
    %v64 = vadd.f32 %v62, %v63
    %v65 = vsel %vm61, %v52, 0.0
    %v66 = vadd.f32 %v64, %v65
    %v67 = vsel %vm61, %v56, 0.0
    %v68 = vadd.f32 %v66, %v67
    %69 = vadd.xlane.f32.xlu0 %v68
    %v70 = vpop.xlane.xlu0 %69
    %v71 = vrot.slane %v70, 4
    %v72 = vadd.f32 %v70, %v71
    %v73 = vrot.slane %v72, 2
    %v74 = vadd.f32 %v72, %v73
    %v75 = vrot.slane %v74, 1
    %v76 = vadd.f32 %v74, %v75
    %s77 = vtos %v76
    %s78 = scalar_lea.smem [#allocation7], 0
    %79 = sst [smem:[%s78]] %s77
    // Predicated region
    $region18: #{tpu_custom_call.1} parent=1 // pred_check
      _
    $region19: #{tpu_custom_call.1} parent=1 // pred_check_branch
      %81 = sbr.rel (0) target = $region21
    $region20: #{tpu_custom_call.1} parent=1 // pred_region
      %s83 = ssub.s32 16, 16
      %84 = vsyncadd [#allocation4], %s83
      %87 = dma.smem_to_hbm [#allocation7], 16, %s2, [#allocation4]
    $region21: #{tpu_custom_call.1} parent=1 // pred_fallthru
      _
    // Predicated region
    $region22: #{tpu_custom_call.1} parent=1 // pred_check
      _
    $region23: #{tpu_custom_call.1} parent=1 // pred_check_branch
      %89 = sbr.rel (0) target = $region25
    $region24: #{tpu_custom_call.1} parent=1 // pred_region
      %90 = dma.done [#allocation4], 16
    $region25: #{tpu_custom_call.1} parent=1 // pred_fallthru
      _
    %91 = sfence
    %92 = vsyncpa [#allocation3], 1
    %93 = vsyncpa [#allocation6], 1
    %94 = vsyncpa [#allocation4], 1

</llo_original>
